<compile_context>
chip_gen: v6e
topology: v6e:2x2x1
jax: 0.10.0
libtpu: 0.0.40
codegen_flags: <defaults>
</compile_context>

<pallas_src>
import functools
import math

import jax
import jax.numpy as jnp
from jax import lax
from jax.experimental import pallas as pl
from jax.experimental.pallas import tpu as pltpu


def _round_up(v, m):
    return -(-v // m) * m


def _logits_lse_kernel(x_ref, w_ref, logits_ref, lse_ref, m_ref, l_ref, *,
                       vocab, tv, compute_dtype):
    # x_ref     : (tm, H)   activation row tile, resident across the vocab axis
    # w_ref     : (tv, H)   weight tile, native nn.Linear (vocab, hidden) layout
    # logits_ref: (tm, tv)  raw (unnormalized) logits for this vocab tile -> HBM
    # lse_ref   : (tm, 1)   per-row logsumexp, written once on the last vocab step
    # m_ref,l_ref: (tm, 1)  f32 running max / running sum-of-exp scratch
    j = pl.program_id(1)
    nj = pl.num_programs(1)

    @pl.when(j == 0)
    def _init():
        m_ref[...] = jnp.full(m_ref.shape, -jnp.inf, dtype=jnp.float32)
        l_ref[...] = jnp.zeros(l_ref.shape, dtype=jnp.float32)

    x = x_ref[...]
    w = w_ref[...]
    if compute_dtype is not None and x.dtype != compute_dtype:
        x = x.astype(compute_dtype)
    if compute_dtype is not None and w.dtype != compute_dtype:
        w = w.astype(compute_dtype)

    # MXU: contract the hidden dim of both operands, (tm,H)x(tv,H) -> (tm,tv),
    # f32 accumulation.  The weight keeps its nn.Linear layout so no transposed
    # HBM copy of it is ever materialized.
    logits = lax.dot_general(
        x, w,
        dimension_numbers=(((1,), (1,)), ((), ())),
        preferred_element_type=jnp.float32)

    if vocab % tv != 0:  # static: only emit the mask when a ragged edge exists
        col = j * tv + lax.broadcasted_iota(jnp.int32, logits.shape, 1)
        logits = jnp.where(col < vocab, logits, -jnp.inf)

    # Lane-dense per-tile writeback of the raw logits (no O(vocab) VMEM cache;
    # the out-of-range columns of a partial edge block are simply not stored).
    logits_ref[...] = logits.astype(logits_ref.dtype)

    # Online logsumexp update (all f32; VPU/EUP/XLU work hidden under the MXU).
    m_prev = m_ref[...]
    m_new = jnp.maximum(m_prev, jnp.max(logits, axis=-1, keepdims=True))
    alpha = jnp.exp(m_prev - m_new)
    l_ref[...] = alpha * l_ref[...] + jnp.sum(
        jnp.exp(logits - m_new), axis=-1, keepdims=True)
    m_ref[...] = m_new

    @pl.when(j == nj - 1)
    def _finalize():
        lse_ref[...] = m_ref[...] + jnp.log(l_ref[...])


def _normalize_kernel(logits_ref, lse_ref, o_ref):
    # log_softmax = logits - logsumexp(logits), broadcast over the vocab tile.
    o_ref[...] = (logits_ref[...].astype(jnp.float32)
                  - lse_ref[...]).astype(o_ref.dtype)


def generator_forward(x, weight, *, tm=256, tv=512, out_dtype=None,
                      compute_dtype=jnp.bfloat16, vmem_limit_bytes=None):
    """Pallas TPU equivalent of `F.log_softmax(x @ weight.T, dim=-1)` (no bias).

    x:             (..., hidden)
    weight:        (vocab, hidden)  -- nn.Linear.weight layout, bias-free.
    out_dtype:     output dtype (default: x.dtype).  bf16 halves the writeback.
    compute_dtype: MXU operand dtype (default bf16, f32 accumulation; None =
                   keep the operands' native dtype).
    """
    hidden = x.shape[-1]
    vocab, w_hidden = weight.shape
    assert w_hidden == hidden, "weight must be (vocab, hidden)"
    lead = x.shape[:-1]
    n = math.prod(lead) if lead else 1
    out_dtype = x.dtype if out_dtype is None else out_dtype
    compute_dtype = None if compute_dtype is None else jnp.dtype(compute_dtype)

    # Row tiling: multiple of 8 sublanes, clamped to the 8-rounded row count.
    tm = max(8, (tm // 8) * 8)
    tm = min(tm, _round_up(n, 8))
    # Vocab tiling: multiple of 128 lanes, clamped to the 128-rounded vocab.
    tv = max(128, (tv // 128) * 128)
    tv = min(tv, _round_up(vocab, 128))
    num_row_tiles = pl.cdiv(n, tm)
    num_vocab_tiles = pl.cdiv(vocab, tv)

    x2d = x.reshape(n, hidden)

    # Advisory cost estimate for XLA scheduling around the custom call.
    w_bytes = int(weight.size) * weight.dtype.itemsize
    x_bytes = int(x2d.size) * x2d.dtype.itemsize
    out_item = jnp.dtype(out_dtype).itemsize
    cost = pl.CostEstimate(
        flops=2 * n * vocab * hidden,
        transcendentals=n * vocab,  # one exp per logit in the online lse
        bytes_accessed=x_bytes + num_row_tiles * w_bytes
                       + n * vocab * out_item + n * 4)

    # VMEM need is O((tm + tv) * hidden + tm * tv), independent of vocab, so
    # the compiler's default scoped limit is sufficient for typical shapes;
    # the knob stays available for very large hidden dims / bigger tiles.
    cp_kwargs = dict(dimension_semantics=("parallel", "arbitrary"))
    if vmem_limit_bytes is not None:
        cp_kwargs["vmem_limit_bytes"] = vmem_limit_bytes

    kernel = functools.partial(
        _logits_lse_kernel, vocab=vocab, tv=tv, compute_dtype=compute_dtype)

    raw_logits, lse = pl.pallas_call(
        kernel,
        out_shape=(jax.ShapeDtypeStruct((n, vocab), out_dtype),
                   jax.ShapeDtypeStruct((n, 1), jnp.float32)),
        grid_spec=pltpu.PrefetchScalarGridSpec(
            num_scalar_prefetch=0,
            grid=(num_row_tiles, num_vocab_tiles),
            in_specs=[
                # Row tile of x: resident across the vocab axis.
                pl.BlockSpec((tm, hidden), lambda i, j: (i, 0)),
                # Weight tile in native (vocab, hidden) layout, streamed over j.
                pl.BlockSpec((tv, hidden), lambda i, j: (j, 0)),
            ],
            out_specs=[
                # Raw logits: one lane-dense (tm, tv) block per grid step.
                pl.BlockSpec((tm, tv), lambda i, j: (i, j)),
                # Per-row logsumexp: resident across j, flushed per row tile.
                pl.BlockSpec((tm, 1), lambda i, j: (i, 0)),
            ],
            scratch_shapes=[
                pltpu.VMEM((tm, 1), jnp.float32),   # running max
                pltpu.VMEM((tm, 1), jnp.float32),   # running sum of exp
            ],
        ),
        compiler_params=pltpu.CompilerParams(**cp_kwargs),
        cost_estimate=cost,
    )(x2d, weight)

    # Pass 2: elementwise normalize with a wider lane-dense vocab tile.
    tvn = min(_round_up(vocab, 128), max(tv, 2048))
    num_vocab_tiles_n = pl.cdiv(vocab, tvn)
    out2d = pl.pallas_call(
        _normalize_kernel,
        out_shape=jax.ShapeDtypeStruct((n, vocab), out_dtype),
        grid_spec=pltpu.PrefetchScalarGridSpec(
            num_scalar_prefetch=0,
            grid=(num_row_tiles, num_vocab_tiles_n),
            in_specs=[
                pl.BlockSpec((tm, tvn), lambda i, j: (i, j)),
                pl.BlockSpec((tm, 1), lambda i, j: (i, 0)),
            ],
            out_specs=pl.BlockSpec((tm, tvn), lambda i, j: (i, j)),
        ),
        compiler_params=pltpu.CompilerParams(
            dimension_semantics=("parallel", "arbitrary")),
    )(raw_logits, lse)

    return out2d.reshape(*lead, vocab)


if __name__ == "__main__":
    # Small shapes consistent with the module: batch=2, seq=8, hidden=32, vocab=128.
    batch, seq, hidden, vocab = 2, 8, 32, 128

    key = jax.random.PRNGKey(0)
    kx, kw, kx2, kw2 = jax.random.split(key, 4)

    x = jax.random.normal(kx, (batch, seq, hidden), dtype=jnp.float32)
    bound = 1.0 / math.sqrt(hidden)  # nn.Linear default init scale
    weight = jax.random.uniform(
        kw, (vocab, hidden), dtype=jnp.float32, minval=-bound, maxval=bound)

    # 1) Native f32 operands: tight comparison against the XLA reference.
    out = jax.block_until_ready(generator_forward(x, weight, compute_dtype=None))
    ref = jax.nn.log_softmax(jnp.einsum("bsh,vh->bsv", x, weight), axis=-1)
    assert out.shape == (batch, seq, vocab)
    assert out.dtype == x.dtype
    assert jnp.allclose(out, ref, atol=1e-5, rtol=1e-5), "mismatch (f32 path)"

    # 2) Default bf16 MXU operands + ragged tiling: rows not a multiple of the
    #    row tile, vocab not a multiple of the vocab tile (multi-tile online
    #    logsumexp + partial edge blocks).  Reference applies the same bf16
    #    operand rounding.
    b2, s2, v2 = 3, 5, 320
    x2 = jax.random.normal(kx2, (b2, s2, hidden), dtype=jnp.float32)
    w2 = jax.random.uniform(
        kw2, (v2, hidden), dtype=jnp.float32, minval=-bound, maxval=bound)
    out2 = jax.block_until_ready(generator_forward(x2, w2, tm=128, tv=128))
    ref2 = jax.nn.log_softmax(
        jnp.einsum("bsh,vh->bsv",
                   x2.astype(jnp.bfloat16), w2.astype(jnp.bfloat16),
                   preferred_element_type=jnp.float32), axis=-1)
    assert out2.shape == (b2, s2, v2)
    assert jnp.allclose(out2, ref2, atol=2e-3, rtol=2e-3), "mismatch (bf16/tiled)"

    print("KERNEL_OK")
</pallas_src>

<mosaic_0001>
module attributes {stable_mosaic.version = 11 : i64} {
  func.func @_logits_lse_kernel(%arg0: i32, %arg1: i32, %arg2: memref<16x32xf32, #tpu.memory_space<vmem>>, %arg3: memref<128x32xf32, #tpu.memory_space<vmem>>, %arg4: memref<16x128xf32, #tpu.memory_space<vmem>>, %arg5: memref<16x1xf32, #tpu.memory_space<vmem>>, %arg6: memref<16x1xf32, #tpu.memory_space<vmem>>, %arg7: memref<16x1xf32, #tpu.memory_space<vmem>>) attributes {dimension_semantics = [#tpu.dimension_semantics<parallel>, #tpu.dimension_semantics<arbitrary>], iteration_bounds = array<i64: 1, 1>, scalar_prefetch = 0 : i64, scratch_operands = 2 : i64, tpu.core_type = #tpu.core_type<tc>, window_params = [{transform_indices = @transform_0, window_bounds = array<i64: 16, 32>}, {transform_indices = @transform_1, window_bounds = array<i64: 128, 32>}, {transform_indices = @transform_2, window_bounds = array<i64: 16, 128>}, {transform_indices = @transform_3, window_bounds = array<i64: 16, 1>}]} {
    %c0_i32 = arith.constant 0 : i32
    %0 = arith.cmpi eq, %arg1, %c0_i32 : i32
    %1 = arith.extui %0 : i1 to i32
    %c0_i32_0 = arith.constant 0 : i32
    %2 = arith.cmpi ne, %1, %c0_i32_0 : i32
    scf.if %2 {
      %cst_18 = arith.constant 0xFF800000 : f32
      %26 = vector.broadcast %cst_18 : f32 to vector<16x1xf32>
      %c0_19 = arith.constant 0 : index
      %c0_20 = arith.constant 0 : index
      %27 = vector.load %arg6[%c0_19, %c0_20] : memref<16x1xf32, #tpu.memory_space<vmem>>, vector<16x1xf32>
      tpu.vector_store %arg6[%c0_19, %c0_20], %26 {strides = array<i32>} : memref<16x1xf32, #tpu.memory_space<vmem>>, vector<16x1xf32>,
      %cst_21 = arith.constant 0.000000e+00 : f32
      %28 = vector.broadcast %cst_21 : f32 to vector<16x1xf32>
      %c0_22 = arith.constant 0 : index
      %c0_23 = arith.constant 0 : index
      %29 = vector.load %arg7[%c0_22, %c0_23] : memref<16x1xf32, #tpu.memory_space<vmem>>, vector<16x1xf32>
      tpu.vector_store %arg7[%c0_22, %c0_23], %28 {strides = array<i32>} : memref<16x1xf32, #tpu.memory_space<vmem>>, vector<16x1xf32>,
    } else {
    }
    %c0 = arith.constant 0 : index
    %c0_1 = arith.constant 0 : index
    %3 = vector.load %arg2[%c0, %c0_1] : memref<16x32xf32, #tpu.memory_space<vmem>>, vector<16x32xf32>
    %c0_2 = arith.constant 0 : index
    %c0_3 = arith.constant 0 : index
    %4 = vector.load %arg3[%c0_2, %c0_3] : memref<128x32xf32, #tpu.memory_space<vmem>>, vector<128x32xf32>
    %cst = arith.constant dense<0.000000e+00> : vector<16x128xf32>
    %5 = tpu.matmul %3, %4, %cst {dimension_numbers = #tpu.dot_dimension_numbers<[1], [1], [0], [0], [0, 0, 1, 0], [], []>} : vector<16x32xf32>, vector<128x32xf32>, vector<16x128xf32> -> vector<16x128xf32>
    %c0_4 = arith.constant 0 : index
    %c0_5 = arith.constant 0 : index
    %6 = vector.load %arg4[%c0_4, %c0_5] : memref<16x128xf32, #tpu.memory_space<vmem>>, vector<16x128xf32>
    tpu.vector_store %arg4[%c0_4, %c0_5], %5 {strides = array<i32>} : memref<16x128xf32, #tpu.memory_space<vmem>>, vector<16x128xf32>,
    %c0_6 = arith.constant 0 : index
    %c0_7 = arith.constant 0 : index
    %7 = vector.load %arg6[%c0_6, %c0_7] : memref<16x1xf32, #tpu.memory_space<vmem>>, vector<16x1xf32>
    %cst_8 = arith.constant dense<0xFF800000> : vector<16xf32>
    %8 = vector.multi_reduction <maximumf>, %5, %cst_8 [1] : vector<16x128xf32> to vector<16xf32>
    %9 = vector.shape_cast %8 : vector<16xf32> to vector<16x1xf32>
    %10 = arith.maximumf %7, %9 : vector<16x1xf32>
    %11 = arith.subf %7, %10 : vector<16x1xf32>
    %12 = math.exp %11 : vector<16x1xf32>
    %c0_9 = arith.constant 0 : index
    %c0_10 = arith.constant 0 : index
    %13 = vector.load %arg7[%c0_9, %c0_10] : memref<16x1xf32, #tpu.memory_space<vmem>>, vector<16x1xf32>
    %14 = arith.mulf %12, %13 : vector<16x1xf32>
    %15 = vector.broadcast %10 : vector<16x1xf32> to vector<16x128xf32>
    %16 = arith.subf %5, %15 : vector<16x128xf32>
    %17 = math.exp %16 : vector<16x128xf32>
    %cst_11 = arith.constant dense<0.000000e+00> : vector<16xf32>
    %18 = vector.multi_reduction <add>, %17, %cst_11 [1] : vector<16x128xf32> to vector<16xf32>
    %19 = vector.shape_cast %18 : vector<16xf32> to vector<16x1xf32>
    %20 = arith.addf %14, %19 : vector<16x1xf32>
    %c0_12 = arith.constant 0 : index
    %c0_13 = arith.constant 0 : index
    %21 = vector.load %arg7[%c0_12, %c0_13] : memref<16x1xf32, #tpu.memory_space<vmem>>, vector<16x1xf32>
    tpu.vector_store %arg7[%c0_12, %c0_13], %20 {strides = array<i32>} : memref<16x1xf32, #tpu.memory_space<vmem>>, vector<16x1xf32>,
    %c0_14 = arith.constant 0 : index
    %c0_15 = arith.constant 0 : index
    %22 = vector.load %arg6[%c0_14, %c0_15] : memref<16x1xf32, #tpu.memory_space<vmem>>, vector<16x1xf32>
    tpu.vector_store %arg6[%c0_14, %c0_15], %10 {strides = array<i32>} : memref<16x1xf32, #tpu.memory_space<vmem>>, vector<16x1xf32>,
    %c0_i32_16 = arith.constant 0 : i32
    %23 = arith.cmpi eq, %arg1, %c0_i32_16 : i32
    %24 = arith.extui %23 : i1 to i32
    %c0_i32_17 = arith.constant 0 : i32
    %25 = arith.cmpi ne, %24, %c0_i32_17 : i32
    scf.if %25 {
      %c0_18 = arith.constant 0 : index
      %c0_19 = arith.constant 0 : index
      %26 = vector.load %arg6[%c0_18, %c0_19] : memref<16x1xf32, #tpu.memory_space<vmem>>, vector<16x1xf32>
      %c0_20 = arith.constant 0 : index
      %c0_21 = arith.constant 0 : index
      %27 = vector.load %arg7[%c0_20, %c0_21] : memref<16x1xf32, #tpu.memory_space<vmem>>, vector<16x1xf32>
      %28 = math.log %27 : vector<16x1xf32>
      %29 = arith.addf %26, %28 : vector<16x1xf32>
      %c0_22 = arith.constant 0 : index
      %c0_23 = arith.constant 0 : index
      %30 = vector.load %arg5[%c0_22, %c0_23] : memref<16x1xf32, #tpu.memory_space<vmem>>, vector<16x1xf32>
      tpu.vector_store %arg5[%c0_22, %c0_23], %29 {strides = array<i32>} : memref<16x1xf32, #tpu.memory_space<vmem>>, vector<16x1xf32>,
    } else {
    }
    return
  }
  func.func @transform_0(%arg0: i32, %arg1: i32) -> (i32, i32) {
    %c0_i32 = arith.constant 0 : i32
    %c0_i32_0 = arith.constant 0 : i32
    return %arg0, %c0_i32 : i32, i32
  }
  func.func @transform_1(%arg0: i32, %arg1: i32) -> (i32, i32) {
    %c0_i32 = arith.constant 0 : i32
    %c0_i32_0 = arith.constant 0 : i32
    return %arg1, %c0_i32 : i32, i32
  }
  func.func @transform_2(%arg0: i32, %arg1: i32) -> (i32, i32) {
    %c0_i32 = arith.constant 0 : i32
    return %arg0, %arg1 : i32, i32
  }
  func.func @transform_3(%arg0: i32, %arg1: i32) -> (i32, i32) {
    %c0_i32 = arith.constant 0 : i32
    %c0_i32_0 = arith.constant 0 : i32
    return %arg0, %c0_i32 : i32, i32
  }
}

</mosaic_0001>

<llo_original>
// kernel: tpu_custom_call.1
$region0: #{tpu_custom_call.1}
  #allocation0 [shape = 'u32[]', space=smem, size = 0x4, offset = 0x4, fixed_abs, tag = 'smem constant byte address 0x4 - core index']
  #allocation1 [shape = 'u32[144,128]{1,0:T(1,128)}', space=vmem, size = 0x12000, scoped, tag = 'internal scratch']
  #allocation2 [shape = 'f32[16,1]{1,0:T(8,128)}', space=vmem, size = 0x2000, scoped, tag = 'scratch operand']
  #allocation3 [shape = 'f32[16,1]{1,0:T(8,128)}', space=vmem, size = 0x2000, scoped, tag = 'scratch operand']
  %s0 = inlined_call_operand.vmem [shape: f32[16,32], index: 0, kind: input, shape index: {}]
  %s1 = inlined_call_operand.vmem [shape: f32[128,32], index: 1, kind: input, shape index: {}]
  %s2 = inlined_call_operand.hbm [shape: f32[16,128], index: 2, kind: output, shape index: {0}]
  %s3 = inlined_call_operand.vmem [shape: f32[16,1], index: 3, kind: output, shape index: {1}]
  %4 = xla_tuple %s2, %s3
  %s5 = sld [smem:[#allocation0]]
  $region34: #{tpu_custom_call.1} parent=0
    _
  %s7 = ssub.s32 1, %s5
  %s8 = scalar_select 0, %s7, %s5
  $region1: #{tpu_custom_call.1} parent=0
    #allocation4 [shape = 'u8[8192]{0}', space=vmem, size = 0x2000, scoped, tag = 'output window, operand 0, single buffered']
    #allocation5 [shape = 's32[1]{0}', space=sflag, size = 0x4, scoped, tag = 'scoped memory for tpu_custom_call.1']
    %9 = vsyncpa [#allocation5], 0
    // Predicated region
    $region2: #{tpu_custom_call.1} parent=1 // pred_check
      _
    $region3: #{tpu_custom_call.1} parent=1 // pred_check_branch
      %11 = sbr.rel (0) target = $region5
    $region4: #{tpu_custom_call.1} parent=1 // pred_region
      _
    $region5: #{tpu_custom_call.1} parent=1 // pred_fallthru
      _
    // Predicated region
    $region6: #{tpu_custom_call.1} parent=1 // pred_check
      _
    $region7: #{tpu_custom_call.1} parent=1 // pred_check_branch
      %13 = sbr.rel (0) target = $region9
    $region8: #{tpu_custom_call.1} parent=1 // pred_region
      _
    $region9: #{tpu_custom_call.1} parent=1 // pred_fallthru
      _
    %p14 = scmp.eq.s32.totalorder 0, 0
    // Predicated region
    $region10: #{tpu_custom_call.1} parent=1 // pred_check
      %p15 = pneg %p14
    $region11: #{tpu_custom_call.1} parent=1 // pred_check_branch
      %17 = sbr.rel (%p15) target = $region13
    $region12: #{tpu_custom_call.1} parent=1 // pred_region
      %vm18 = vcmask 7168
      %19 = vst.msk [vmem:[#allocation2] sm:$0xff] %vm18, -inf
      %20 = vst.msk [vmem:[#allocation2 + $0x8] sm:$0xff] %vm18, -inf
      %21 = vst.msk [vmem:[#allocation3] sm:$0xff] %vm18, 0.0
      %22 = vst.msk [vmem:[#allocation3 + $0x8] sm:$0xff] %vm18, 0.0
    $region13: #{tpu_custom_call.1} parent=1 // pred_fallthru
      _
    %v23 = vld [vmem:[%s0] sm:$0xff]
    %v24 = vld [vmem:[%s0 + $0x8] sm:$0xff]
    %v25 = vld [vmem:[%s1] sm:$0xff]
    %v26 = vld [vmem:[%s1 + $0x8] sm:$0xff]
    %v27 = vld [vmem:[%s1 + $0x10] sm:$0xff]
    %v28 = vld [vmem:[%s1 + $0x18] sm:$0xff]
    %v29 = vld [vmem:[%s1 + $0x20] sm:$0xff]
    %v30 = vld [vmem:[%s1 + $0x28] sm:$0xff]
    %v31 = vld [vmem:[%s1 + $0x30] sm:$0xff]
    %v32 = vld [vmem:[%s1 + $0x38] sm:$0xff]
    %v33 = vld [vmem:[%s1 + $0x40] sm:$0xff]
    %v34 = vld [vmem:[%s1 + $0x48] sm:$0xff]
    %v35 = vld [vmem:[%s1 + $0x50] sm:$0xff]
    %v36 = vld [vmem:[%s1 + $0x58] sm:$0xff]
    %v37 = vld [vmem:[%s1 + $0x60] sm:$0xff]
    %v38 = vld [vmem:[%s1 + $0x68] sm:$0xff]
    %v39 = vld [vmem:[%s1 + $0x70] sm:$0xff]
    %v40 = vld [vmem:[%s1 + $0x78] sm:$0xff]
    %vm41 = vcmask 261120
    %v43 = vsel %vm41, %v23, 0
    %v46 = vsel %vm41, %v24, 0
    %v49 = vsel %vm41, %v25, 0
    %v52 = vsel %vm41, %v26, 0
    %v55 = vsel %vm41, %v27, 0
    %v58 = vsel %vm41, %v28, 0
    %v61 = vsel %vm41, %v29, 0
    %v64 = vsel %vm41, %v30, 0
    %v67 = vsel %vm41, %v31, 0
    %v70 = vsel %vm41, %v32, 0
    %v73 = vsel %vm41, %v33, 0
    %v76 = vsel %vm41, %v34, 0
    %v79 = vsel %vm41, %v35, 0
    %v82 = vsel %vm41, %v36, 0
    %v85 = vsel %vm41, %v37, 0
    %v88 = vsel %vm41, %v38, 0
    %v91 = vsel %vm41, %v39, 0
    %v94 = vsel %vm41, %v40, 0
    %96 = vmatprep.subr.mxu0 0.0
    %97 = vmatpush1.xpose.msra.mxu0 %v94
    %98 = vmatprep.subr.mxu0 0.0
    %99 = vmatpush1.xpose.msra.mxu0 %v91
    %100 = vmatprep.subr.mxu0 0.0
    %101 = vmatpush1.xpose.msra.mxu0 %v88
    %102 = vmatprep.subr.mxu0 0.0
    %103 = vmatpush1.xpose.msra.mxu0 %v85
    %104 = vmatprep.subr.mxu0 0.0
    %105 = vmatpush1.xpose.msra.mxu0 %v82
    %106 = vmatprep.subr.mxu0 0.0
    %107 = vmatpush1.xpose.msra.mxu0 %v79
    %108 = vmatprep.subr.mxu0 0.0
    %109 = vmatpush1.xpose.msra.mxu0 %v76
    %110 = vmatprep.subr.mxu0 0.0
    %111 = vmatpush1.xpose.msra.mxu0 %v73
    %112 = vmatprep.subr.mxu0 0.0
    %113 = vmatpush1.xpose.msra.mxu0 %v70
    %114 = vmatprep.subr.mxu0 0.0
    %115 = vmatpush1.xpose.msra.mxu0 %v67
    %116 = vmatprep.subr.mxu0 0.0
    %117 = vmatpush1.xpose.msra.mxu0 %v64
    %118 = vmatprep.subr.mxu0 0.0
    %119 = vmatpush1.xpose.msra.mxu0 %v61
    %120 = vmatprep.subr.mxu0 0.0
    %121 = vmatpush1.xpose.msra.mxu0 %v58
    %122 = vmatprep.subr.mxu0 0.0
    %123 = vmatpush1.xpose.msra.mxu0 %v55
    %124 = vmatprep.subr.mxu0 0.0
    %125 = vmatpush1.xpose.msra.mxu0 %v52
    %126 = vmatprep.subr.mxu0 0.0
    %127 = vmatpush1.xpose.msra.mxu0 %v49
    %128 = vmatprep.subr.mxu0 0.0
    %129 = vmatpush2.xpose.msra.mxu0 0.0
    %130 = vmatprep.subr.mxu0 0.0
    %131 = vmatpush2.xpose.msra.mxu0 0.0
    %132 = vmatprep.subr.mxu0 0.0
    %133 = vmatpush2.xpose.msra.mxu0 0.0
    %134 = vmatprep.subr.mxu0 0.0
    %135 = vmatpush2.xpose.msra.mxu0 0.0
    %136 = vmatprep.subr.mxu0 0.0
    %137 = vmatpush2.xpose.msra.mxu0 0.0
    %138 = vmatprep.subr.mxu0 0.0
    %139 = vmatpush2.xpose.msra.mxu0 0.0
    %140 = vmatprep.subr.mxu0 0.0
    %141 = vmatpush2.xpose.msra.mxu0 0.0
    %142 = vmatprep.subr.mxu0 0.0
    %143 = vmatpush2.xpose.msra.mxu0 0.0
    %144 = vmatprep.subr.mxu0 0.0
    %145 = vmatpush2.xpose.msra.mxu0 0.0
    %146 = vmatprep.subr.mxu0 0.0
    %147 = vmatpush2.xpose.msra.mxu0 0.0
    %148 = vmatprep.subr.mxu0 0.0
    %149 = vmatpush2.xpose.msra.mxu0 0.0
    %150 = vmatprep.subr.mxu0 0.0
    %151 = vmatpush2.xpose.msra.mxu0 0.0
    %152 = vmatprep.subr.mxu0 0.0
    %153 = vmatpush2.xpose.msra.mxu0 0.0
    %154 = vmatprep.subr.mxu0 0.0
    %155 = vmatpush2.xpose.msra.mxu0 0.0
    %156 = vmatprep.subr.mxu0 0.0
    %157 = vmatpush2.xpose.msra.mxu0 0.0
    %158 = vmatprep.subr.mxu0 0.0
    %159 = vmatpush2.xpose.msra.mxu0 0.0
    %160 = vmatprep.mubr.f32.mxu0 0.0
    %161 = vmatmul.mubr.f32.gmra.mxu0 %v43
    %v162 = vpop.f32.mrf.mxu0
    %v163 = vadd.f32 0.0, %v162
    %v164 = vpop.f32.mrf.mxu0
    %165 = vmatprep.mubr.f32.mxu0 0.0
    %166 = vmatmul.mubr.f32.gmra.mxu0 %v46
    %v167 = vpop.f32.mrf.mxu0
    %v168 = vadd.f32 0.0, %v167
    %v169 = vpop.f32.mrf.mxu0
    %170 = vdwg.mxu0
    %171 = vst [vmem:[#allocation4] sm:$0xff] %v163
    %172 = vst [vmem:[#allocation4 + $0x8] sm:$0xff] %v168
    %v173 = vld [vmem:[#allocation2] sm:$0xff]
    %v174 = vld [vmem:[#allocation2 + $0x8] sm:$0xff]
    %175 = vmax.xlane.f32.xlu0 %v163
    %v176 = vpop.xlane.xlu0 %175
    %177 = vmax.xlane.f32.xlu0 %v168
    %v178 = vpop.xlane.xlu0 %177
    %v179 = vmax.f32 %v173, %v176
    %v180 = vmax.f32 %v174, %v178
    %v181 = vsub.f32 %v173, %v179
    %v182 = vsub.f32 %v174, %v180
    %v183 = vmul.f32 %v181, 1.442695
    %v184 = vpow.pop %v183
    %v185 = vmul.f32 %v182, 1.442695
    %v186 = vpow.pop %v185
    %v187 = vld [vmem:[#allocation3] sm:$0xff]
    %v188 = vld [vmem:[#allocation3 + $0x8] sm:$0xff]
    %v189 = vmul.f32 %v184, %v187
    %v190 = vmul.f32 %v186, %v188
    %192 = vset.pattern.permute.xlu0 0
    %193 = vperm.xlu0 %192, %v179
    %v194 = vpop.permute.xlu0 %193
    %197 = vset.pattern.permute.xlu0 0
    %198 = vperm.xlu0 %197, %v180
    %v199 = vpop.permute.xlu0 %198
    %v201 = vsub.f32 %v163, %v194
    %v202 = vsub.f32 %v168, %v199
    %v203 = vmul.f32 %v201, 1.442695
    %v204 = vpow.pop %v203
    %v205 = vmul.f32 %v202, 1.442695
    %v206 = vpow.pop %v205
    %207 = vadd.xlane.f32.xlu0 %v204
    %v208 = vpop.xlane.xlu0 %207
    %209 = vadd.xlane.f32.xlu0 %v206
    %v210 = vpop.xlane.xlu0 %209
    %v211 = vadd.f32 %v189, %v208
    %v212 = vadd.f32 %v190, %v210
    %vm213 = vcmask 7168
    %214 = vst.msk [vmem:[#allocation3] sm:$0xff] %vm213, %v211
    %215 = vst.msk [vmem:[#allocation3 + $0x8] sm:$0xff] %vm213, %v212
    %216 = vst.msk [vmem:[#allocation2] sm:$0xff] %vm213, %v179
    %217 = vst.msk [vmem:[#allocation2 + $0x8] sm:$0xff] %vm213, %v180
    // Predicated region
    $region14: #{tpu_custom_call.1} parent=1 // pred_check
      %p218 = pneg %p14
    $region15: #{tpu_custom_call.1} parent=1 // pred_check_branch
      %220 = sbr.rel (%p218) target = $region17
    $region16: #{tpu_custom_call.1} parent=1 // pred_region
      %v221 = vld [vmem:[#allocation2] sm:$0xff]
      %v222 = vld [vmem:[#allocation2 + $0x8] sm:$0xff]
      %v223 = vld [vmem:[#allocation3] sm:$0xff]
      %v224 = vld [vmem:[#allocation3 + $0x8] sm:$0xff]
      %v225 = vlog2.pop %v223
      %v226 = vmul.f32 %v225, 0.6931472
      %v227 = vlog2.pop %v224
      %v228 = vmul.f32 %v227, 0.6931472
      %v229 = vadd.f32 %v221, %v226
      %v230 = vadd.f32 %v222, %v228
      %231 = vst.msk [vmem:[%s3] sm:$0xff] %vm213, %v229
      %232 = vst.msk [vmem:[%s3 + $0x8] sm:$0xff] %vm213, %v230
    $region17: #{tpu_custom_call.1} parent=1 // pred_fallthru
      _
    // Predicated region
    $region18: #{tpu_custom_call.1} parent=1 // pred_check
      _
    $region19: #{tpu_custom_call.1} parent=1 // pred_check_branch
      %234 = sbr.rel (0) target = $region21
    $region20: #{tpu_custom_call.1} parent=1 // pred_region
      %s236 = ssub.s32 256, 256
      %237 = vsyncadd [#allocation5], %s236
      %s238 = sshll.u32 [#allocation4], 4
      %s239 = int_to_ptr.vmem [resolvable:$true] %s238
      %244 = dma.vmem_to_hbm [thread:$0]  %s239, 256, %s2, [#allocation5], 128, 128, 8
    $region21: #{tpu_custom_call.1} parent=1 // pred_fallthru
      _
    // Predicated region
    $region22: #{tpu_custom_call.1} parent=1 // pred_check
      _
    $region23: #{tpu_custom_call.1} parent=1 // pred_check_branch
      %246 = sbr.rel (0) target = $region25
    $region24: #{tpu_custom_call.1} parent=1 // pred_region
      _
    $region25: #{tpu_custom_call.1} parent=1 // pred_fallthru
      _
    // Predicated region
    $region26: #{tpu_custom_call.1} parent=1 // pred_check
      _
    $region27: #{tpu_custom_call.1} parent=1 // pred_check_branch
      %248 = sbr.rel (0) target = $region29
    $region28: #{tpu_custom_call.1} parent=1 // pred_region
      %249 = dma.done [#allocation5], 256
    $region29: #{tpu_custom_call.1} parent=1 // pred_fallthru
      _
    // Predicated region
    $region30: #{tpu_custom_call.1} parent=1 // pred_check
      _
    $region31: #{tpu_custom_call.1} parent=1 // pred_check_branch
      %251 = sbr.rel (0) target = $region33
    $region32: #{tpu_custom_call.1} parent=1 // pred_region
      _
    $region33: #{tpu_custom_call.1} parent=1 // pred_fallthru
      _
    %252 = vsyncpa [#allocation5], 1

</llo_original>
